<compile_context>
chip_gen: v5e
topology: v5e:2x2
jax: 0.10.0
libtpu: 0.0.40
codegen_flags: <defaults>
</compile_context>

<pallas_src>
import functools

import numpy as np
import jax
import jax.numpy as jnp
from jax.experimental import pallas as pl
from jax.experimental.pallas import tpu as pltpu

# Synthetic stand-in for the external `cfg` used by the PyTorch module.
CFG_CLOTH_TYPES = ("upper", "pants", "skirts")
CFG_MIN_DIST_THRESH = {"upper": 0.05, "pants": 0.05, "skirts": 0.08}

_BIG = 1e20                  # "excluded" sentinel in squared-distance space
_CLAMP2 = 9999.0 * 9999.0    # squared version of the reference's `9999` clamp
_COORD_SENTINEL = 1.0e4      # coords for invalid / padded verts (d2 ~ 3e8)


def _round_up(x, m):
    return (x + m - 1) // m * m


def _sdf_dp_loss_kernel(sdf_ref, cloth_ref, tpl_ref, out_ref,
                        min_d2_ref, min_d2m_ref, loss_sum_ref, pos_sum_ref,
                        *, min_thr2, dist_thr2, sdf_thresh, inv_n):
    """Grid = (batch, N tiles, V tiles); V is the inner (min) reduction axis."""
    n = pl.program_id(1)
    v = pl.program_id(2)
    n_last = pl.num_programs(1) - 1
    v_last = pl.num_programs(2) - 1

    @pl.when(jnp.logical_and(n == 0, v == 0))
    def _init_batch():
        loss_sum_ref[...] = jnp.zeros_like(loss_sum_ref)
        pos_sum_ref[...] = jnp.zeros_like(pos_sum_ref)

    @pl.when(v == 0)
    def _init_n_tile():
        min_d2_ref[...] = jnp.full_like(min_d2_ref, _BIG)
        min_d2m_ref[...] = jnp.full_like(min_d2m_ref, _BIG)

    tpl = tpl_ref[0]        # (Vc, 8): cols [-2s | ||s||^2 | 1 | pen | 0 | 0]
    cloth = cloth_ref[0]    # (8, Nc): rows [c ; 1 ; ||c||^2 ; 0 ; lane_valid ; 0]

    # Squared distances on the MXU: the contraction yields
    #   d2 = ||s||^2 - 2 s.c + ||c||^2
    # (the penalty / lane_valid columns contract against zero rows/cols).
    d2 = jnp.dot(tpl, cloth, preferred_element_type=jnp.float32,
                 precision=jax.lax.Precision.HIGHEST)              # (Vc, Nc)

    # Reference's `dists < min_dist_thresh -> 9999` clamp in squared space
    # (also absorbs any tiny negative d2 from the matmul decomposition).
    d2 = jnp.where(d2 < min_thr2, _CLAMP2, d2)
    # + per-vertex additive penalty: 0 for valid cloth-matching verts, BIG else.
    d2m = d2 + tpl[:, 5:6]

    min_d2_ref[...] = jnp.minimum(min_d2_ref[...],
                                  jnp.min(d2, axis=0, keepdims=True))
    min_d2m_ref[...] = jnp.minimum(min_d2m_ref[...],
                                   jnp.min(d2m, axis=0, keepdims=True))

    @pl.when(v == v_last)
    def _finish_n_tile():
        sdf_row = sdf_ref[0]                       # (1, Nc)
        lane_valid = cloth[6:7, :]                 # (1, Nc): 0 on padded lanes
        md2 = min_d2_ref[...]
        md2m = min_d2m_ref[...]
        near = (md2 < dist_thr2).astype(jnp.float32)
        # Nearest valid vert is cloth-matching iff the matching-min ties the
        # global min (matching verts are a subset of the valid verts).
        pos = md2m <= md2
        loss_row = lane_valid * near * jnp.where(pos, jnp.abs(sdf_row),
                                                 jnp.abs(sdf_row - sdf_thresh))
        loss_sum_ref[...] += jnp.sum(loss_row, axis=1, keepdims=True)
        pos_sum_ref[...] += jnp.sum(lane_valid * pos.astype(jnp.float32),
                                    axis=1, keepdims=True)

    @pl.when(jnp.logical_and(n == n_last, v == v_last))
    def _finalize_batch():
        cloth_exist = (pos_sum_ref[...] > 0.0).astype(jnp.float32)
        out_ref[0] = loss_sum_ref[...] * inv_n * cloth_exist


def sdf_dp_loss(sdf, cloth_meshes_unposed, smpl_cloth_idx, smpl_cloth_valid,
                cloth_idx, sdf_thresh, dist_thresh, v_template,
                n_tile=None, v_tile=None):
    """Pallas implementation of SdfDPLoss.forward. Returns a (B,) loss vector."""
    f32 = jnp.float32
    B, N = sdf.shape
    V = v_template.shape[1]

    # Host-side cfg lookup (static) -- mirrors the PyTorch module's cfg use.
    cloth_type = CFG_CLOTH_TYPES[int(cloth_idx[0]) - 1]
    min_dist_thresh = CFG_MIN_DIST_THRESH[cloth_type]

    # ---- tile sizes (kept modest so they also fit v7x's 64 MiB VMEM) -------
    if n_tile is None:
        n_tile = 512 if N >= 512 else _round_up(N, 128)
    n_tile = _round_up(min(n_tile, _round_up(N, 128)), 128)
    if v_tile is None:
        v_tile = 256 if V >= 256 else _round_up(V, 8)
    v_tile = _round_up(min(v_tile, _round_up(V, 8)), 8)
    n_pad = _round_up(N, n_tile)
    v_pad = _round_up(V, v_tile)

    # ---- host-side (XLA) glue: fold masks into the operands ----------------
    vt = v_template.astype(f32)
    valid = smpl_cloth_valid > 0                                     # (B, V)
    ids = smpl_cloth_idx.astype(jnp.int32)
    member = jnp.any(ids[..., None] ==
                     jnp.asarray(cloth_idx, jnp.int32).reshape(1, 1, -1),
                     axis=-1)                                        # (B, V)
    match = jnp.logical_and(member, valid)                           # (B, V)

    if v_pad > V:
        vt = jnp.pad(vt, ((0, 0), (0, v_pad - V), (0, 0)))
        valid = jnp.pad(valid, ((0, 0), (0, v_pad - V)))    # False -> sentinel
        match = jnp.pad(match, ((0, 0), (0, v_pad - V)))    # False -> BIG pen

    coords = jnp.where(valid[..., None], vt, _COORD_SENTINEL)        # (B, Vp, 3)
    s2 = jnp.sum(coords * coords, axis=-1, keepdims=True)            # (B, Vp, 1)
    pen = jnp.where(match, 0.0, _BIG).astype(f32)[..., None]         # (B, Vp, 1)
    ones_v = jnp.ones((B, v_pad, 1), f32)
    zeros_v = jnp.zeros((B, v_pad, 2), f32)
    # Augmented template: cols [-2s | ||s||^2 | 1 | pen | 0 | 0] -> (B, Vp, 8)
    tpl_aug = jnp.concatenate([-2.0 * coords, s2, ones_v, pen, zeros_v], axis=-1)

    cv = cloth_meshes_unposed.astype(f32)                            # (B, N, 3)
    lane_valid = jnp.ones((B, 1, N), f32)
    sdf3 = sdf.astype(f32).reshape(B, 1, N)
    if n_pad > N:
        cv = jnp.pad(cv, ((0, 0), (0, n_pad - N), (0, 0)),
                     constant_values=_COORD_SENTINEL)
        lane_valid = jnp.pad(lane_valid, ((0, 0), (0, 0), (0, n_pad - N)))
        sdf3 = jnp.pad(sdf3, ((0, 0), (0, 0), (0, n_pad - N)))
    c_t = jnp.transpose(cv, (0, 2, 1))                               # (B, 3, Np)
    cn2 = jnp.sum(cv * cv, axis=-1)[:, None, :]                      # (B, 1, Np)
    ones_n = jnp.ones((B, 1, n_pad), f32)
    zeros_n = jnp.zeros((B, 1, n_pad), f32)
    # Augmented cloth: rows [c ; 1 ; ||c||^2 ; 0 ; lane_valid ; 0] -> (B, 8, Np)
    cloth_aug = jnp.concatenate(
        [c_t, ones_n, cn2, zeros_n, lane_valid, zeros_n], axis=1)

    kernel = functools.partial(
        _sdf_dp_loss_kernel,
        min_thr2=float(min_dist_thresh) ** 2,
        dist_thr2=float(dist_thresh) ** 2,
        sdf_thresh=float(sdf_thresh),
        inv_n=1.0 / float(N))

    grid = (B, n_pad // n_tile, v_pad // v_tile)
    out = pl.pallas_call(
        kernel,
        out_shape=jax.ShapeDtypeStruct((B, 1, 1), f32),
        grid=grid,
        in_specs=[
            pl.BlockSpec((1, 1, n_tile), lambda b, n, v: (b, 0, n)),  # sdf
            pl.BlockSpec((1, 8, n_tile), lambda b, n, v: (b, 0, n)),  # cloth aug
            pl.BlockSpec((1, v_tile, 8), lambda b, n, v: (b, v, 0)),  # template aug
        ],
        out_specs=pl.BlockSpec((1, 1, 1), lambda b, n, v: (b, 0, 0)),
        scratch_shapes=[
            pltpu.VMEM((1, n_tile), f32),    # running min d2 (all valid verts)
            pltpu.VMEM((1, n_tile), f32),    # running min d2 (matching verts)
            pltpu.VMEM((1, 1), f32),         # partial loss sum
            pltpu.VMEM((1, 1), f32),         # partial pos count
        ],
        compiler_params=pltpu.CompilerParams(
            dimension_semantics=("parallel", "arbitrary", "arbitrary"),
            vmem_limit_bytes=48 * 1024 * 1024),
        # TODO(synk): for B == 1 on v7x, also split the N grid axis across the
        # two TensorCores (per-tile partial sums + a tiny second-stage reduce)
        # so the second core is not idle.
    )(sdf3, cloth_aug, tpl_aug)
    return out.reshape(B)


def _ref_numpy(sdf, cloth, smpl_idx, smpl_valid, cloth_idx, sdf_thresh,
               dist_thresh, v_template):
    """Faithful NumPy port of the PyTorch forward (for verification)."""
    cloth_type = CFG_CLOTH_TYPES[int(cloth_idx[0]) - 1]
    min_dist_thresh = CFG_MIN_DIST_THRESH[cloth_type]
    B = sdf.shape[0]
    losses = []
    for b in range(B):
        mask = smpl_valid[b] > 0
        sv = v_template[b][mask]                                # (M, 3)
        cv = cloth[b]                                           # (N, 3)
        if sv.shape[0] == 0:
            losses.append(np.float32(0.0))
            continue
        dists = np.sqrt(((sv[None, :, :] - cv[:, None, :]) ** 2).sum(2))  # (N, M)
        dists = dists.copy()
        dists[dists < min_dist_thresh] = 9999.0
        qidx = dists.argmin(1)
        dmin = dists.min(1)
        tci = smpl_idx[b][mask][qidx]
        match = np.zeros_like(tci, dtype=np.int64)
        for idx in np.asarray(cloth_idx):
            match += (tci == idx).astype(np.int64)
        loss_pos = np.abs(sdf[b]) * (match > 0) * (dmin < dist_thresh)
        loss_neg = np.abs(sdf[b] - sdf_thresh) * (match == 0) * (dmin < dist_thresh)
        cloth_exist = np.float32((match > 0).sum() > 0)
        losses.append(np.float32((loss_pos + loss_neg).mean() * cloth_exist))
    return np.asarray(losses, dtype=np.float32)


if __name__ == "__main__":
    # Small shapes that still exercise N/V padding and multi-tile accumulation.
    B, N_CLOTH, V_SMPL = 2, 200, 200

    key = jax.random.PRNGKey(0)
    k1, k2, k3, k4, k5 = jax.random.split(key, 5)
    sdf = jax.random.normal(k1, (B, N_CLOTH), dtype=jnp.float32) * 0.1
    cloth_meshes_unposed = jax.random.normal(k2, (B, N_CLOTH, 3), dtype=jnp.float32) * 0.3
    v_template = jax.random.normal(k3, (B, V_SMPL, 3), dtype=jnp.float32) * 0.3
    smpl_cloth_idx = jax.random.randint(k4, (B, V_SMPL), 0, 4, dtype=jnp.int32)
    smpl_cloth_valid = (jax.random.uniform(k5, (B, V_SMPL)) > 0.3).astype(jnp.float32)
    cloth_idx = jnp.array([1, 2], dtype=jnp.int32)
    sdf_thresh = 0.1
    dist_thresh = 0.6

    loss = sdf_dp_loss(sdf, cloth_meshes_unposed, smpl_cloth_idx,
                       smpl_cloth_valid, cloth_idx, sdf_thresh, dist_thresh,
                       v_template, n_tile=128, v_tile=128)
    loss = jax.block_until_ready(loss)

    ref = _ref_numpy(np.asarray(sdf), np.asarray(cloth_meshes_unposed),
                     np.asarray(smpl_cloth_idx), np.asarray(smpl_cloth_valid),
                     np.asarray(cloth_idx), sdf_thresh, dist_thresh,
                     np.asarray(v_template))
    np.testing.assert_allclose(np.asarray(loss), ref, rtol=1e-4, atol=1e-5)

    print("KERNEL_OK")
</pallas_src>

<mosaic_0001>
module attributes {stable_mosaic.version = 11 : i64} {
  func.func @_sdf_dp_loss_kernel(%arg0: i32, %arg1: i32, %arg2: i32, %arg3: memref<1x1x128xf32, #tpu.memory_space<vmem>>, %arg4: memref<1x8x128xf32, #tpu.memory_space<vmem>>, %arg5: memref<1x128x8xf32, #tpu.memory_space<vmem>>, %arg6: memref<1x1x1xf32, #tpu.memory_space<vmem>>, %arg7: memref<1x128xf32, #tpu.memory_space<vmem>>, %arg8: memref<1x128xf32, #tpu.memory_space<vmem>>, %arg9: memref<1x1xf32, #tpu.memory_space<vmem>>, %arg10: memref<1x1xf32, #tpu.memory_space<vmem>>) attributes {dimension_semantics = [#tpu.dimension_semantics<parallel>, #tpu.dimension_semantics<arbitrary>, #tpu.dimension_semantics<arbitrary>], iteration_bounds = array<i64: 2, 2, 2>, scalar_prefetch = 0 : i64, scratch_operands = 4 : i64, tpu.core_type = #tpu.core_type<tc>, window_params = [{transform_indices = @transform_0, window_bounds = array<i64: 1, 1, 128>}, {transform_indices = @transform_1, window_bounds = array<i64: 1, 8, 128>}, {transform_indices = @transform_2, window_bounds = array<i64: 1, 128, 8>}, {transform_indices = @transform_3, window_bounds = array<i64: 1, 1, 1>}]} {
    %c0_i32 = arith.constant 0 : i32
    %0 = arith.cmpi eq, %arg1, %c0_i32 : i32
    %c0_i32_0 = arith.constant 0 : i32
    %1 = arith.cmpi eq, %arg2, %c0_i32_0 : i32
    %2 = arith.andi %0, %1 : i1
    %3 = arith.extui %2 : i1 to i32
    %c0_i32_1 = arith.constant 0 : i32
    %4 = arith.cmpi ne, %3, %c0_i32_1 : i32
    scf.if %4 {
      %cst_25 = arith.constant 0.000000e+00 : f32
      %38 = vector.broadcast %cst_25 : f32 to vector<1x1xf32>
      %c0_26 = arith.constant 0 : index
      %c0_27 = arith.constant 0 : index
      %39 = vector.load %arg9[%c0_26, %c0_27] : memref<1x1xf32, #tpu.memory_space<vmem>>, vector<1x1xf32>
      tpu.vector_store %arg9[%c0_26, %c0_27], %38 {strides = array<i32>} : memref<1x1xf32, #tpu.memory_space<vmem>>, vector<1x1xf32>,
      %cst_28 = arith.constant 0.000000e+00 : f32
      %40 = vector.broadcast %cst_28 : f32 to vector<1x1xf32>
      %c0_29 = arith.constant 0 : index
      %c0_30 = arith.constant 0 : index
      %41 = vector.load %arg10[%c0_29, %c0_30] : memref<1x1xf32, #tpu.memory_space<vmem>>, vector<1x1xf32>
      tpu.vector_store %arg10[%c0_29, %c0_30], %40 {strides = array<i32>} : memref<1x1xf32, #tpu.memory_space<vmem>>, vector<1x1xf32>,
    } else {
    }
    %c0_i32_2 = arith.constant 0 : i32
    %5 = arith.cmpi eq, %arg2, %c0_i32_2 : i32
    %6 = arith.extui %5 : i1 to i32
    %c0_i32_3 = arith.constant 0 : i32
    %7 = arith.cmpi ne, %6, %c0_i32_3 : i32
    scf.if %7 {
      %cst_25 = arith.constant 1.000000e+20 : f32
      %38 = vector.broadcast %cst_25 : f32 to vector<1x128xf32>
      %c0_26 = arith.constant 0 : index
      %c0_27 = arith.constant 0 : index
      %39 = vector.load %arg7[%c0_26, %c0_27] : memref<1x128xf32, #tpu.memory_space<vmem>>, vector<1x128xf32>
      tpu.vector_store %arg7[%c0_26, %c0_27], %38 {strides = array<i32>} : memref<1x128xf32, #tpu.memory_space<vmem>>, vector<1x128xf32>,
      %cst_28 = arith.constant 1.000000e+20 : f32
      %40 = vector.broadcast %cst_28 : f32 to vector<1x128xf32>
      %c0_29 = arith.constant 0 : index
      %c0_30 = arith.constant 0 : index
      %41 = vector.load %arg8[%c0_29, %c0_30] : memref<1x128xf32, #tpu.memory_space<vmem>>, vector<1x128xf32>
      tpu.vector_store %arg8[%c0_29, %c0_30], %40 {strides = array<i32>} : memref<1x128xf32, #tpu.memory_space<vmem>>, vector<1x128xf32>,
    } else {
    }
    %c0 = arith.constant 0 : index
    %c0_4 = arith.constant 0 : index
    %c0_5 = arith.constant 0 : index
    %8 = vector.load %arg5[%c0, %c0_4, %c0_5] : memref<1x128x8xf32, #tpu.memory_space<vmem>>, vector<1x128x8xf32>
    %9 = vector.shape_cast %8 : vector<1x128x8xf32> to vector<128x8xf32>
    %c0_6 = arith.constant 0 : index
    %c0_7 = arith.constant 0 : index
    %c0_8 = arith.constant 0 : index
    %10 = vector.load %arg4[%c0_6, %c0_7, %c0_8] : memref<1x8x128xf32, #tpu.memory_space<vmem>>, vector<1x8x128xf32>
    %11 = vector.shape_cast %10 : vector<1x8x128xf32> to vector<8x128xf32>
    %cst = arith.constant dense<0.000000e+00> : vector<128x128xf32>
    %12 = tpu.matmul %9, %11, %cst {dimension_numbers = #tpu.dot_dimension_numbers<[1], [0], [0], [1], [0, 0, 1, 1], [], []>, precision = #tpu.contract_precision<fp32>} : vector<128x8xf32>, vector<8x128xf32>, vector<128x128xf32> -> vector<128x128xf32>
    %cst_9 = arith.constant 2.500000e-03 : f32
    %13 = vector.broadcast %cst_9 : f32 to vector<128x128xf32>
    %14 = arith.cmpf olt, %12, %13 : vector<128x128xf32>
    %cst_10 = arith.constant 9.998000e+07 : f32
    %15 = vector.broadcast %cst_10 : f32 to vector<128x128xf32>
    %16 = arith.select %14, %15, %12 : vector<128x128xi1>, vector<128x128xf32>
    %17 = vector.extract_strided_slice %9 {offsets = [0, 5], sizes = [128, 1], strides = [1, 1]} : vector<128x8xf32> to vector<128x1xf32>
    %18 = vector.broadcast %17 : vector<128x1xf32> to vector<128x128xf32>
    %19 = arith.addf %16, %18 : vector<128x128xf32>
    %c0_11 = arith.constant 0 : index
    %c0_12 = arith.constant 0 : index
    %20 = vector.load %arg7[%c0_11, %c0_12] : memref<1x128xf32, #tpu.memory_space<vmem>>, vector<1x128xf32>
    %cst_13 = arith.constant dense<0x7F800000> : vector<128xf32>
    %21 = vector.multi_reduction <minimumf>, %16, %cst_13 [0] : vector<128x128xf32> to vector<128xf32>
    %22 = vector.shape_cast %21 : vector<128xf32> to vector<1x128xf32>
    %23 = arith.minimumf %20, %22 : vector<1x128xf32>
    %c0_14 = arith.constant 0 : index
    %c0_15 = arith.constant 0 : index
    %24 = vector.load %arg7[%c0_14, %c0_15] : memref<1x128xf32, #tpu.memory_space<vmem>>, vector<1x128xf32>
    tpu.vector_store %arg7[%c0_14, %c0_15], %23 {strides = array<i32>} : memref<1x128xf32, #tpu.memory_space<vmem>>, vector<1x128xf32>,
    %c0_16 = arith.constant 0 : index
    %c0_17 = arith.constant 0 : index
    %25 = vector.load %arg8[%c0_16, %c0_17] : memref<1x128xf32, #tpu.memory_space<vmem>>, vector<1x128xf32>
    %cst_18 = arith.constant dense<0x7F800000> : vector<128xf32>
    %26 = vector.multi_reduction <minimumf>, %19, %cst_18 [0] : vector<128x128xf32> to vector<128xf32>
    %27 = vector.shape_cast %26 : vector<128xf32> to vector<1x128xf32>
    %28 = arith.minimumf %25, %27 : vector<1x128xf32>
    %c0_19 = arith.constant 0 : index
    %c0_20 = arith.constant 0 : index
    %29 = vector.load %arg8[%c0_19, %c0_20] : memref<1x128xf32, #tpu.memory_space<vmem>>, vector<1x128xf32>
    tpu.vector_store %arg8[%c0_19, %c0_20], %28 {strides = array<i32>} : memref<1x128xf32, #tpu.memory_space<vmem>>, vector<1x128xf32>,
    %c1_i32 = arith.constant 1 : i32
    %30 = arith.cmpi eq, %arg2, %c1_i32 : i32
    %31 = arith.extui %30 : i1 to i32
    %c0_i32_21 = arith.constant 0 : i32
    %32 = arith.cmpi ne, %31, %c0_i32_21 : i32
    scf.if %32 {
      %c0_25 = arith.constant 0 : index
      %c0_26 = arith.constant 0 : index
      %c0_27 = arith.constant 0 : index
      %38 = vector.load %arg3[%c0_25, %c0_26, %c0_27] : memref<1x1x128xf32, #tpu.memory_space<vmem>>, vector<1x1x128xf32>
      %39 = vector.shape_cast %38 : vector<1x1x128xf32> to vector<1x128xf32>
      %40 = vector.extract_strided_slice %11 {offsets = [6, 0], sizes = [1, 128], strides = [1, 1]} : vector<8x128xf32> to vector<1x128xf32>
      %c0_28 = arith.constant 0 : index
      %c0_29 = arith.constant 0 : index
      %41 = vector.load %arg7[%c0_28, %c0_29] : memref<1x128xf32, #tpu.memory_space<vmem>>, vector<1x128xf32>
      %c0_30 = arith.constant 0 : index
      %c0_31 = arith.constant 0 : index
      %42 = vector.load %arg8[%c0_30, %c0_31] : memref<1x128xf32, #tpu.memory_space<vmem>>, vector<1x128xf32>
      %cst_32 = arith.constant 3.600000e-01 : f32
      %43 = vector.broadcast %cst_32 : f32 to vector<1x128xf32>
      %44 = arith.cmpf olt, %41, %43 : vector<1x128xf32>
      %45 = arith.extui %44 : vector<1x128xi1> to vector<1x128xi32>
      %46 = arith.sitofp %45 : vector<1x128xi32> to vector<1x128xf32>
      %47 = arith.cmpf ole, %42, %41 : vector<1x128xf32>
      %48 = arith.mulf %40, %46 : vector<1x128xf32>
      %49 = math.absf %39 : vector<1x128xf32>
      %cst_33 = arith.constant 1.000000e-01 : f32
      %50 = vector.broadcast %cst_33 : f32 to vector<1x128xf32>
      %51 = arith.subf %39, %50 : vector<1x128xf32>
      %52 = math.absf %51 : vector<1x128xf32>
      %53 = arith.select %47, %49, %52 : vector<1x128xi1>, vector<1x128xf32>
      %54 = arith.mulf %48, %53 : vector<1x128xf32>
      %c0_34 = arith.constant 0 : index
      %c0_35 = arith.constant 0 : index
      %55 = vector.load %arg9[%c0_34, %c0_35] : memref<1x1xf32, #tpu.memory_space<vmem>>, vector<1x1xf32>
      %cst_36 = arith.constant dense<0.000000e+00> : vector<1xf32>
      %56 = vector.multi_reduction <add>, %54, %cst_36 [1] : vector<1x128xf32> to vector<1xf32>
      %57 = vector.shape_cast %56 : vector<1xf32> to vector<1x1xf32>
      %58 = arith.addf %55, %57 : vector<1x1xf32>
      %c0_37 = arith.constant 0 : index
      %c0_38 = arith.constant 0 : index
      %59 = vector.load %arg9[%c0_37, %c0_38] : memref<1x1xf32, #tpu.memory_space<vmem>>, vector<1x1xf32>
      tpu.vector_store %arg9[%c0_37, %c0_38], %58 {strides = array<i32>} : memref<1x1xf32, #tpu.memory_space<vmem>>, vector<1x1xf32>,
      %c0_39 = arith.constant 0 : index
      %c0_40 = arith.constant 0 : index
      %60 = vector.load %arg10[%c0_39, %c0_40] : memref<1x1xf32, #tpu.memory_space<vmem>>, vector<1x1xf32>
      %61 = arith.extui %47 : vector<1x128xi1> to vector<1x128xi32>
      %62 = arith.sitofp %61 : vector<1x128xi32> to vector<1x128xf32>
      %63 = arith.mulf %40, %62 : vector<1x128xf32>
      %cst_41 = arith.constant dense<0.000000e+00> : vector<1xf32>
      %64 = vector.multi_reduction <add>, %63, %cst_41 [1] : vector<1x128xf32> to vector<1xf32>
      %65 = vector.shape_cast %64 : vector<1xf32> to vector<1x1xf32>
      %66 = arith.addf %60, %65 : vector<1x1xf32>
      %c0_42 = arith.constant 0 : index
      %c0_43 = arith.constant 0 : index
      %67 = vector.load %arg10[%c0_42, %c0_43] : memref<1x1xf32, #tpu.memory_space<vmem>>, vector<1x1xf32>
      tpu.vector_store %arg10[%c0_42, %c0_43], %66 {strides = array<i32>} : memref<1x1xf32, #tpu.memory_space<vmem>>, vector<1x1xf32>,
    } else {
    }
    %c1_i32_22 = arith.constant 1 : i32
    %33 = arith.cmpi eq, %arg1, %c1_i32_22 : i32
    %c1_i32_23 = arith.constant 1 : i32
    %34 = arith.cmpi eq, %arg2, %c1_i32_23 : i32
    %35 = arith.andi %33, %34 : i1
    %36 = arith.extui %35 : i1 to i32
    %c0_i32_24 = arith.constant 0 : i32
    %37 = arith.cmpi ne, %36, %c0_i32_24 : i32
    scf.if %37 {
      %c0_25 = arith.constant 0 : index
      %c0_26 = arith.constant 0 : index
      %38 = vector.load %arg10[%c0_25, %c0_26] : memref<1x1xf32, #tpu.memory_space<vmem>>, vector<1x1xf32>
      %cst_27 = arith.constant 0.000000e+00 : f32
      %39 = vector.broadcast %cst_27 : f32 to vector<1x1xf32>
      %40 = arith.cmpf ogt, %38, %39 : vector<1x1xf32>
      %41 = arith.extui %40 : vector<1x1xi1> to vector<1x1xi32>
      %42 = arith.sitofp %41 : vector<1x1xi32> to vector<1x1xf32>
      %c0_28 = arith.constant 0 : index
      %c0_29 = arith.constant 0 : index
      %43 = vector.load %arg9[%c0_28, %c0_29] : memref<1x1xf32, #tpu.memory_space<vmem>>, vector<1x1xf32>
      %cst_30 = arith.constant 5.000000e-03 : f32
      %44 = vector.broadcast %cst_30 : f32 to vector<1x1xf32>
      %45 = arith.mulf %43, %44 : vector<1x1xf32>
      %46 = arith.mulf %45, %42 : vector<1x1xf32>
      %c0_31 = arith.constant 0 : index
      %c0_32 = arith.constant 0 : index
      %c0_33 = arith.constant 0 : index
      %47 = vector.load %arg6[%c0_31, %c0_32, %c0_33] : memref<1x1x1xf32, #tpu.memory_space<vmem>>, vector<1x1x1xf32>
      %48 = vector.shape_cast %47 : vector<1x1x1xf32> to vector<1x1xf32>
      %49 = vector.shape_cast %46 : vector<1x1xf32> to vector<1x1x1xf32>
      tpu.vector_store %arg6[%c0_31, %c0_32, %c0_33], %49 {strides = array<i32>} : memref<1x1x1xf32, #tpu.memory_space<vmem>>, vector<1x1x1xf32>,
    } else {
    }
    return
  }
  func.func @transform_0(%arg0: i32, %arg1: i32, %arg2: i32) -> (i32, i32, i32) {
    %c0_i32 = arith.constant 0 : i32
    %c0_i32_0 = arith.constant 0 : i32
    return %arg0, %c0_i32, %arg1 : i32, i32, i32
  }
  func.func @transform_1(%arg0: i32, %arg1: i32, %arg2: i32) -> (i32, i32, i32) {
    %c0_i32 = arith.constant 0 : i32
    %c0_i32_0 = arith.constant 0 : i32
    return %arg0, %c0_i32, %arg1 : i32, i32, i32
  }
  func.func @transform_2(%arg0: i32, %arg1: i32, %arg2: i32) -> (i32, i32, i32) {
    %c0_i32 = arith.constant 0 : i32
    %c0_i32_0 = arith.constant 0 : i32
    return %arg0, %arg2, %c0_i32 : i32, i32, i32
  }
  func.func @transform_3(%arg0: i32, %arg1: i32, %arg2: i32) -> (i32, i32, i32) {
    %c0_i32 = arith.constant 0 : i32
    %c0_i32_0 = arith.constant 0 : i32
    %c0_i32_1 = arith.constant 0 : i32
    return %arg0, %c0_i32, %c0_i32_0 : i32, i32, i32
  }
}

</mosaic_0001>

<llo_original>
// kernel: tpu_custom_call.1
$region0: #{tpu_custom_call.1}
  #allocation0 [shape = 'u32[]', space=smem, size = 0x4, offset = 0x4, fixed_abs, tag = 'smem constant byte address 0x4 - core index']
  #allocation1 [shape = 'u32[72,128]{1,0:T(1,128)}', space=vmem, size = 0x9000, scoped, tag = 'internal scratch']
  #allocation2 [shape = 'f32[1,128]{1,0:T(1,128)}', space=vmem, size = 0x200, scoped, tag = 'scratch operand']
  #allocation3 [shape = 'f32[1,128]{1,0:T(1,128)}', space=vmem, size = 0x200, scoped, tag = 'scratch operand']
  #allocation4 [shape = 'f32[1,1]{1,0:T(1,128)}', space=vmem, size = 0x200, scoped, tag = 'scratch operand']
  #allocation5 [shape = 'f32[1,1]{1,0:T(1,128)}', space=vmem, size = 0x200, scoped, tag = 'scratch operand']
  %s0 = inlined_call_operand.vmem [shape: f32[2,1,256], index: 0, kind: input, shape index: {}]
  %s1 = inlined_call_operand.vmem [shape: f32[2,8,256], index: 1, kind: input, shape index: {}]
  %s2 = inlined_call_operand.vmem [shape: f32[2,256,8], index: 2, kind: input, shape index: {}]
  %s3 = inlined_call_operand.vmem [shape: f32[2,1,1], index: 3, kind: output, shape index: {}]
  %s4 = sld [smem:[#allocation0]]
  $region61: #{tpu_custom_call.1} parent=0
    _
  %s6 = ssub.s32 1, %s4
  %s7 = scalar_select 0, %s6, %s4
  loop: start=0, step=1, limit=10
  $region2: #{tpu_custom_call.1} parent=0 // loop_pre_header
    _
  $region3: #{tpu_custom_call.1} parent=0 // loop_header
    %s9 = sphi 0, %s13
    %p10 = scmp.ge.s32.totalorder %s9, 10
    %s16 = sphi 0, %s35
    %s17 = sphi 0, %s31
    %s18 = sphi 0, %s27
    %s19 = sphi 0, %s16
    %s20 = sphi 0, %s17
    %s21 = sphi 0, %s18
    %s22 = sphi 0, %s19
    %s23 = sphi 0, %s20
    %s24 = sphi 0, %s21
    %s40 = sphi 0, %s42
    %s43 = sphi 0, %s40
    %s44 = sphi 0, %s43
    %s60 = sphi 0, %s44
    %s68 = sphi 0, %s70
    %s71 = sphi 0, %s68
    %s72 = sphi 0, %s71
    %s88 = sphi 0, %s72
    %s96 = sphi 0, %s98
    %s99 = sphi 0, %s96
    %s100 = sphi 0, %s99
    %s116 = sphi 0, %s100
    %s122 = sphi 0, %s124
    %s125 = sphi 0, %s122
    %s126 = sphi 0, %s125
    %s142 = sphi 0, %s126
  $region4: #{tpu_custom_call.1} parent=0 // loop_header_branch
    %12 = sbr.rel (%p10) target = $region8
  $region5: #{tpu_custom_call.1} parent=0 // loop_body
    %s14 = ssub.s32 %s9, 1
    %s15 = ssub.s32 %s9, 2
    %s25 = sadd.s32 1, %s18
    %p26 = scmp.ge.s32.totalorder %s25, 2
    %s27 = scalar_select %p26, 0, %s25
    %s28 = sadd.s32 1, %s17
    %s29 = scalar_select %p26, %s28, %s17
    %p30 = scmp.ge.s32.totalorder %s29, 2
    %s31 = scalar_select %p30, 0, %s29
    %s32 = sadd.s32 1, %s16
    %s33 = scalar_select %p30, %s32, %s16
    %p34 = scmp.ge.s32.totalorder %s33, 2
    %s35 = scalar_select %p34, 0, %s33
    %s36 = ssub.s32 %s16, %s35
    %s37 = ssub.s32 %s17, %s31
    %s38 = sor.u32 %s36, %s37
    %p39 = scmp.eq.s32.totalorder %s38, 0
    %s41 = sadd.s32 %s40, 1
    %s42 = scalar_select %p39, %s40, %s41
    %p45 = pneg %p39
    %p46 = scmp.eq.s32.totalorder %s9, 7
    %p47 = por %p45, %p46
    %p48 = scmp.ne.s32.totalorder %s40, %s43
    %p49 = scmp.eq.s32.totalorder %s9, 0
    %p50 = por %p48, %p49
    %p51 = scmp.ne.s32.totalorder %s40, %s43
    %p52 = scmp.eq.s32.totalorder %s14, 7
    %p53 = por %p51, %p52
    %p54 = scmp.ne.s32.totalorder %s43, %s44
    %p55 = scmp.eq.s32.totalorder %s14, 0
    %p56 = por %p54, %p55
    %p57 = scmp.ne.s32.totalorder %s43, %s44
    %p58 = scmp.eq.s32.totalorder %s15, 7
    %p59 = por %p57, %p58
    %p61 = scmp.ne.s32.totalorder %s44, %s60
    %p62 = scmp.eq.s32.totalorder %s15, 0
    %p63 = por %p61, %p62
    %s64 = ssub.s32 %s16, %s35
    %s65 = ssub.s32 %s17, %s31
    %s66 = sor.u32 %s64, %s65
    %p67 = scmp.eq.s32.totalorder %s66, 0
    %s69 = sadd.s32 %s68, 1
    %s70 = scalar_select %p67, %s68, %s69
    %p73 = pneg %p67
    %p74 = scmp.eq.s32.totalorder %s9, 7
    %p75 = por %p73, %p74
    %p76 = scmp.ne.s32.totalorder %s68, %s71
    %p77 = scmp.eq.s32.totalorder %s9, 0
    %p78 = por %p76, %p77
    %p79 = scmp.ne.s32.totalorder %s68, %s71
    %p80 = scmp.eq.s32.totalorder %s14, 7
    %p81 = por %p79, %p80
    %p82 = scmp.ne.s32.totalorder %s71, %s72
    %p83 = scmp.eq.s32.totalorder %s14, 0
    %p84 = por %p82, %p83
    %p85 = scmp.ne.s32.totalorder %s71, %s72
    %p86 = scmp.eq.s32.totalorder %s15, 7
    %p87 = por %p85, %p86
    %p89 = scmp.ne.s32.totalorder %s72, %s88
    %p90 = scmp.eq.s32.totalorder %s15, 0
    %p91 = por %p89, %p90
    %s92 = ssub.s32 %s16, %s35
    %s93 = ssub.s32 %s18, %s27
    %s94 = sor.u32 %s92, %s93
    %p95 = scmp.eq.s32.totalorder %s94, 0
    %s97 = sadd.s32 %s96, 1
    %s98 = scalar_select %p95, %s96, %s97
    %p101 = pneg %p95
    %p102 = scmp.eq.s32.totalorder %s9, 7
    %p103 = por %p101, %p102
    %p104 = scmp.ne.s32.totalorder %s96, %s99
    %p105 = scmp.eq.s32.totalorder %s9, 0
    %p106 = por %p104, %p105
    %p107 = scmp.ne.s32.totalorder %s96, %s99
    %p108 = scmp.eq.s32.totalorder %s14, 7
    %p109 = por %p107, %p108
    %p110 = scmp.ne.s32.totalorder %s99, %s100
    %p111 = scmp.eq.s32.totalorder %s14, 0
    %p112 = por %p110, %p111
    %p113 = scmp.ne.s32.totalorder %s99, %s100
    %p114 = scmp.eq.s32.totalorder %s15, 7
    %p115 = por %p113, %p114
    %p117 = scmp.ne.s32.totalorder %s100, %s116
    %p118 = scmp.eq.s32.totalorder %s15, 0
    %p119 = por %p117, %p118
    %s120 = ssub.s32 %s16, %s35
    %p121 = scmp.eq.s32.totalorder %s120, 0
    %s123 = sadd.s32 %s122, 1
    %s124 = scalar_select %p121, %s122, %s123
    %p127 = pneg %p121
    %p128 = scmp.eq.s32.totalorder %s9, 7
    %p129 = por %p127, %p128
    %p130 = scmp.ne.s32.totalorder %s122, %s125
    %p131 = scmp.eq.s32.totalorder %s9, 0
    %p132 = por %p130, %p131
    %p133 = scmp.ne.s32.totalorder %s122, %s125
    %p134 = scmp.eq.s32.totalorder %s14, 7
    %p135 = por %p133, %p134
    %p136 = scmp.ne.s32.totalorder %s125, %s126
    %p137 = scmp.eq.s32.totalorder %s14, 0
    %p138 = por %p136, %p137
    %p139 = scmp.ne.s32.totalorder %s125, %s126
    %p140 = scmp.eq.s32.totalorder %s15, 7
    %p141 = por %p139, %p140
    %p143 = scmp.ne.s32.totalorder %s126, %s142
    %p144 = scmp.eq.s32.totalorder %s15, 0
    %p145 = por %p143, %p144
    %p146 = scmp.le.s32.totalorder 1, %s9
    %p147 = scmp.lt.s32.totalorder %s9, 9
    %p148 = pnand %p146, %p147
    %p149 = pneg %p148
    // Predicated region
    $region9: #{tpu_custom_call.1} parent=5 // pred_check
      _
    $region10: #{tpu_custom_call.1} parent=5 // pred_check_branch
      %151 = sbr.rel (%p148) target = $region12
    $region11: #{tpu_custom_call.1} parent=5 // pred_region
      %s152 = ssub.s32 %s9, 1
    $region12: #{tpu_custom_call.1} parent=5 // pred_fallthru
      _
    %p153 = scmp.lt.s32.totalorder %s9, 8
    // Predicated region
    $region13: #{tpu_custom_call.1} parent=5 // pred_check
      %p154 = pneg %p153
    $region14: #{tpu_custom_call.1} parent=5 // pred_check_branch
      %156 = sbr.rel (%p154) target = $region16
    $region15: #{tpu_custom_call.1} parent=5 // pred_region
      // Predicated region
      $region17: #{tpu_custom_call.1} parent=15 // pred_check
        %p157 = pneg %p50
      $region18: #{tpu_custom_call.1} parent=15 // pred_check_branch
        %159 = sbr.rel (%p157) target = $region20
      $region19: #{tpu_custom_call.1} parent=15 // pred_region
        %p160 = scmp.lt.s32.totalorder %s16, 1
        %s161 = scalar_select %p160, %s16, 1
        %p162 = scmp.lt.s32.totalorder %s17, 1
        %s163 = scalar_select %p162, %s17, 1
        %s164 = smul.addr %s161, 2
        %s165 = sadd.s32 %s163, %s164
        %s166 = scalar_lea.vmem %s0, %s165
      $region20: #{tpu_custom_call.1} parent=15 // pred_fallthru
        _
      // Predicated region
      $region21: #{tpu_custom_call.1} parent=15 // pred_check
        %p167 = pneg %p78
      $region22: #{tpu_custom_call.1} parent=15 // pred_check_branch
        %169 = sbr.rel (%p167) target = $region24
      $region23: #{tpu_custom_call.1} parent=15 // pred_region
        %p170 = scmp.lt.s32.totalorder %s16, 1
        %s171 = scalar_select %p170, %s16, 1
        %p172 = scmp.lt.s32.totalorder %s17, 1
        %s173 = scalar_select %p172, %s17, 1
        %s174 = smul.addr %s171, 2
        %s175 = sadd.s32 %s173, %s174
        %s176 = smul.addr %s175, 8
        %s177 = scalar_lea.vmem %s1, %s176
      $region24: #{tpu_custom_call.1} parent=15 // pred_fallthru
        _
      // Predicated region
      $region25: #{tpu_custom_call.1} parent=15 // pred_check
        %p178 = pneg %p106
      $region26: #{tpu_custom_call.1} parent=15 // pred_check_branch
        %180 = sbr.rel (%p178) target = $region28
      $region27: #{tpu_custom_call.1} parent=15 // pred_region
        %s181 = smul.u32 16, %s18
        %p182 = scmp.lt.s32.totalorder %s16, 1
        %s183 = scalar_select %p182, %s16, 1
        %p184 = scmp.lt.s32.totalorder %s181, 31
        %s185 = scalar_select %p184, %s181, 31
        %s186 = smul.addr %s183, 32
        %s187 = sadd.s32 %s185, %s186
        %s188 = smul.addr %s187, 8
        %s189 = scalar_lea.vmem %s2, %s188
        %s190 = smul.u32 16, %s18
      $region28: #{tpu_custom_call.1} parent=15 // pred_fallthru
        _
    $region16: #{tpu_custom_call.1} parent=5 // pred_fallthru
      _
    %p191 = scmp.le.s32.totalorder 1, %s9
    %p192 = scmp.lt.s32.totalorder %s9, 9
    %p193 = pnand %p191, %p192
    %p194 = pneg %p193
    // Predicated region
    $region29: #{tpu_custom_call.1} parent=5 // pred_check
      _
    $region30: #{tpu_custom_call.1} parent=5 // pred_check_branch
      %196 = sbr.rel (%p193) target = $region32
    $region31: #{tpu_custom_call.1} parent=5 // pred_region
      %s197 = ssub.s32 %s9, 1
      %p198 = scmp.lt.s32.totalorder %s19, 1
      %s199 = scalar_select %p198, %s19, 1
      %p200 = scmp.lt.s32.totalorder %s20, 1
      %s201 = scalar_select %p200, %s20, 1
      %s202 = smul.addr %s199, 2
      %s203 = sadd.s32 %s201, %s202
      %s204 = scalar_lea.vmem %s0, %s203
      %p205 = pneg %p56
      %p206 = pneg %p53
      %p207 = scmp.lt.s32.totalorder %s19, 1
      %s208 = scalar_select %p207, %s19, 1
      %p209 = scmp.lt.s32.totalorder %s20, 1
      %s210 = scalar_select %p209, %s20, 1
      %s211 = smul.addr %s208, 2
      %s212 = sadd.s32 %s210, %s211
      %s213 = smul.addr %s212, 8
      %s214 = scalar_lea.vmem %s1, %s213
      %p215 = pneg %p84
      %p216 = pneg %p81
      %s217 = smul.u32 16, %s21
      %p218 = scmp.lt.s32.totalorder %s19, 1
      %s219 = scalar_select %p218, %s19, 1
      %p220 = scmp.lt.s32.totalorder %s217, 31
      %s221 = scalar_select %p220, %s217, 31
      %s222 = smul.addr %s219, 32
      %s223 = sadd.s32 %s221, %s222
      %s224 = smul.addr %s223, 8
      %s225 = scalar_lea.vmem %s2, %s224
      %p226 = pneg %p112
      %p227 = pneg %p109
      %p228 = pneg %p138
      %p229 = pneg %p135
      %p230 = scmp.lt.s32.totalorder %s19, 1
      %s231 = scalar_select %p230, %s19, 1
      %s232 = scalar_lea.vmem %s3, %s231
      %p233 = scmp.lt.s32.totalorder %s19, 1
      %s234 = scalar_select %p233, %s19, 1
      %p235 = scmp.lt.s32.totalorder %s20, 1
      %s236 = scalar_select %p235, %s20, 1
      %s237 = smul.addr %s234, 2
      %s238 = sadd.s32 %s236, %s237
      %s239 = scalar_lea.vmem %s0, %s238
      %p240 = scmp.lt.s32.totalorder %s19, 1
      %s241 = scalar_select %p240, %s19, 1
      %p242 = scmp.lt.s32.totalorder %s20, 1
      %s243 = scalar_select %p242, %s20, 1
      %s244 = smul.addr %s241, 2
      %s245 = sadd.s32 %s243, %s244
      %s246 = smul.addr %s245, 8
      %s247 = scalar_lea.vmem %s1, %s246
      %s248 = smul.u32 16, %s21
      %p249 = scmp.lt.s32.totalorder %s19, 1
      %s250 = scalar_select %p249, %s19, 1
      %p251 = scmp.lt.s32.totalorder %s248, 31
      %s252 = scalar_select %p251, %s248, 31
      %s253 = smul.addr %s250, 32
      %s254 = sadd.s32 %s252, %s253
      %s255 = smul.addr %s254, 8
      %s256 = scalar_lea.vmem %s2, %s255
      %s257 = smul.u32 16, %s21
      %p258 = scmp.lt.s32.totalorder %s19, 1
      %s259 = scalar_select %p258, %s19, 1
      %s260 = scalar_lea.vmem %s3, %s259
      %p261 = scmp.eq.s32.totalorder %s20, 0
      %p262 = scmp.eq.s32.totalorder %s21, 0
      %p263 = pnand %p261, %p262
      %p264 = pneg %p263
      // Predicated region
      $region33: #{tpu_custom_call.1} parent=31 // pred_check
        _
      $region34: #{tpu_custom_call.1} parent=31 // pred_check_branch
        %266 = sbr.rel (%p263) target = $region36
      $region35: #{tpu_custom_call.1} parent=31 // pred_region
        %vm267 = vcmask 0
        %268 = vst.msk [vmem:[#allocation4] sm:$0x1] %vm267, 0.0
        %269 = vst.msk [vmem:[#allocation5] sm:$0x1] %vm267, 0.0
      $region36: #{tpu_custom_call.1} parent=31 // pred_fallthru
        _
      // Predicated region
      $region37: #{tpu_custom_call.1} parent=31 // pred_check
        %p270 = pneg %p262
      $region38: #{tpu_custom_call.1} parent=31 // pred_check_branch
        %272 = sbr.rel (%p270) target = $region40
      $region39: #{tpu_custom_call.1} parent=31 // pred_region
        %273 = vst [vmem:[#allocation2] sm:$0x1] 1e+20
        %274 = vst [vmem:[#allocation3] sm:$0x1] 1e+20
      $region40: #{tpu_custom_call.1} parent=31 // pred_fallthru
        _
      %v275 = vld [vmem:[%s256] sm:$0xff]
      %v276 = vld [vmem:[%s256 + $0x8] sm:$0xff]
      %v277 = vld [vmem:[%s256 + $0x10] sm:$0xff]
      %v278 = vld [vmem:[%s256 + $0x18] sm:$0xff]
      %v279 = vld [vmem:[%s256 + $0x20] sm:$0xff]
      %v280 = vld [vmem:[%s256 + $0x28] sm:$0xff]
      %v281 = vld [vmem:[%s256 + $0x30] sm:$0xff]
      %v282 = vld [vmem:[%s256 + $0x38] sm:$0xff]
      %v283 = vld [vmem:[%s256 + $0x40] sm:$0xff]
      %v284 = vld [vmem:[%s256 + $0x48] sm:$0xff]
      %v285 = vld [vmem:[%s256 + $0x50] sm:$0xff]
      %v286 = vld [vmem:[%s256 + $0x58] sm:$0xff]
      %v287 = vld [vmem:[%s256 + $0x60] sm:$0xff]
      %v288 = vld [vmem:[%s256 + $0x68] sm:$0xff]
      %v289 = vld [vmem:[%s256 + $0x70] sm:$0xff]
      %v290 = vld [vmem:[%s256 + $0x78] sm:$0xff]
      %v291 = vld [vmem:[%s247] sm:$0xff]
      %vm292 = vcmask 64512
      %v294 = vsel %vm292, %v275, 0
      %v297 = vsel %vm292, %v276, 0
      %v300 = vsel %vm292, %v277, 0
      %v303 = vsel %vm292, %v278, 0
      %v306 = vsel %vm292, %v279, 0
      %v309 = vsel %vm292, %v280, 0
      %v312 = vsel %vm292, %v281, 0
      %v315 = vsel %vm292, %v282, 0
      %v318 = vsel %vm292, %v283, 0
      %v321 = vsel %vm292, %v284, 0
      %v324 = vsel %vm292, %v285, 0
      %v327 = vsel %vm292, %v286, 0
      %v330 = vsel %vm292, %v287, 0
      %v333 = vsel %vm292, %v288, 0
      %v336 = vsel %vm292, %v289, 0
      %v339 = vsel %vm292, %v290, 0
      %341 = vmatpush.msra.mxu0 0.0
      %342 = vmatpush.msra.mxu0 0.0
      %343 = vmatpush.msra.mxu0 0.0
      %344 = vmatpush.msra.mxu0 0.0
      %345 = vmatpush.msra.mxu0 0.0
      %346 = vmatpush.msra.mxu0 0.0
      %347 = vmatpush.msra.mxu0 0.0
      %348 = vmatpush.msra.mxu0 0.0
      %349 = vmatpush.msra.mxu0 0.0
      %350 = vmatpush.msra.mxu0 0.0
      %351 = vmatpush.msra.mxu0 0.0
      %352 = vmatpush.msra.mxu0 0.0
      %353 = vmatpush.msra.mxu0 0.0
      %354 = vmatpush.msra.mxu0 0.0
      %355 = vmatpush.msra.mxu0 0.0
      %v356 = vand.u32 %v291, 4294901760
      %357 = vmatpush.msra.mxu0 %v356
      %v358 = vand.u32 %v294, 4294901760
      %v359 = vsub.f32 %v294, %v358
      %v360 = vand.u32 %v359, 4294901760
      %v361 = vsub.f32 %v359, %v360
      %v362 = vand.u32 %v361, 4294901760
      %363 = vmatmul.f32.gmra.mxu0 %v362
      %v364 = vpop.f32.mrf.mxu0
      %v365 = vadd.f32 0.0, %v364
      %v366 = vand.u32 %v297, 4294901760
      %v367 = vsub.f32 %v297, %v366
      %v368 = vand.u32 %v367, 4294901760
      %v369 = vsub.f32 %v367, %v368
      %v370 = vand.u32 %v369, 4294901760
      %371 = vmatmul.f32.gmra.mxu0 %v370
      %v372 = vpop.f32.mrf.mxu0
      %v373 = vadd.f32 0.0, %v372
      %v374 = vand.u32 %v300, 4294901760
      %v375 = vsub.f32 %v300, %v374
      %v376 = vand.u32 %v375, 4294901760
      %v377 = vsub.f32 %v375, %v376
      %v378 = vand.u32 %v377, 4294901760
      %379 = vmatmul.f32.gmra.mxu0 %v378
      %v380 = vpop.f32.mrf.mxu0
      %v381 = vadd.f32 0.0, %v380
      %v382 = vand.u32 %v303, 4294901760
      %v383 = vsub.f32 %v303, %v382
      %v384 = vand.u32 %v383, 4294901760
      %v385 = vsub.f32 %v383, %v384
      %v386 = vand.u32 %v385, 4294901760
      %387 = vmatmul.f32.gmra.mxu0 %v386
      %v388 = vpop.f32.mrf.mxu0
      %v389 = vadd.f32 0.0, %v388
      %v390 = vand.u32 %v306, 4294901760
      %v391 = vsub.f32 %v306, %v390
      %v392 = vand.u32 %v391, 4294901760
      %v393 = vsub.f32 %v391, %v392
      %v394 = vand.u32 %v393, 4294901760
      %395 = vmatmul.f32.gmra.mxu0 %v394
      %v396 = vpop.f32.mrf.mxu0
      %v397 = vadd.f32 0.0, %v396
      %v398 = vand.u32 %v309, 4294901760
      %v399 = vsub.f32 %v309, %v398
      %v400 = vand.u32 %v399, 4294901760
      %v401 = vsub.f32 %v399, %v400
      %v402 = vand.u32 %v401, 4294901760
      %403 = vmatmul.f32.gmra.mxu0 %v402
      %v404 = vpop.f32.mrf.mxu0
      %v405 = vadd.f32 0.0, %v404
      %v406 = vand.u32 %v312, 4294901760
      %v407 = vsub.f32 %v312, %v406
      %v408 = vand.u32 %v407, 4294901760
      %v409 = vsub.f32 %v407, %v408
      %v410 = vand.u32 %v409, 4294901760
      %411 = vmatmul.f32.gmra.mxu0 %v410
      %v412 = vpop.f32.mrf.mxu0
      %v413 = vadd.f32 0.0, %v412
      %v414 = vand.u32 %v315, 4294901760
      %v415 = vsub.f32 %v315, %v414
      %v416 = vand.u32 %v415, 4294901760
      %v417 = vsub.f32 %v415, %v416
      %v418 = vand.u32 %v417, 4294901760
      %419 = vmatmul.f32.gmra.mxu0 %v418
      %v420 = vpop.f32.mrf.mxu0
      %v421 = vadd.f32 0.0, %v420
      %v422 = vand.u32 %v318, 4294901760
      %v423 = vsub.f32 %v318, %v422
      %v424 = vand.u32 %v423, 4294901760
      %v425 = vsub.f32 %v423, %v424
      %v426 = vand.u32 %v425, 4294901760
      %427 = vmatmul.f32.gmra.mxu0 %v426
      %v428 = vpop.f32.mrf.mxu0
      %v429 = vadd.f32 0.0, %v428
      %v430 = vand.u32 %v321, 4294901760
      %v431 = vsub.f32 %v321, %v430
      %v432 = vand.u32 %v431, 4294901760
      %v433 = vsub.f32 %v431, %v432
      %v434 = vand.u32 %v433, 4294901760
      %435 = vmatmul.f32.gmra.mxu0 %v434
      %v436 = vpop.f32.mrf.mxu0
      %v437 = vadd.f32 0.0, %v436
      %v438 = vand.u32 %v324, 4294901760
      %v439 = vsub.f32 %v324, %v438
      %v440 = vand.u32 %v439, 4294901760
      %v441 = vsub.f32 %v439, %v440
      %v442 = vand.u32 %v441, 4294901760
      %443 = vmatmul.f32.gmra.mxu0 %v442
      %v444 = vpop.f32.mrf.mxu0
      %v445 = vadd.f32 0.0, %v444
      %v446 = vand.u32 %v327, 4294901760
      %v447 = vsub.f32 %v327, %v446
      %v448 = vand.u32 %v447, 4294901760
      %v449 = vsub.f32 %v447, %v448
      %v450 = vand.u32 %v449, 4294901760
      %451 = vmatmul.f32.gmra.mxu0 %v450
      %v452 = vpop.f32.mrf.mxu0
      %v453 = vadd.f32 0.0, %v452
      %v454 = vand.u32 %v330, 4294901760
      %v455 = vsub.f32 %v330, %v454
      %v456 = vand.u32 %v455, 4294901760
      %v457 = vsub.f32 %v455, %v456
      %v458 = vand.u32 %v457, 4294901760
      %459 = vmatmul.f32.gmra.mxu0 %v458
      %v460 = vpop.f32.mrf.mxu0
      %v461 = vadd.f32 0.0, %v460
      %v462 = vand.u32 %v333, 4294901760
      %v463 = vsub.f32 %v333, %v462
      %v464 = vand.u32 %v463, 4294901760
      %v465 = vsub.f32 %v463, %v464
      %v466 = vand.u32 %v465, 4294901760
      %467 = vmatmul.f32.gmra.mxu0 %v466
      %v468 = vpop.f32.mrf.mxu0
      %v469 = vadd.f32 0.0, %v468
      %v470 = vand.u32 %v336, 4294901760
      %v471 = vsub.f32 %v336, %v470
      %v472 = vand.u32 %v471, 4294901760
      %v473 = vsub.f32 %v471, %v472
      %v474 = vand.u32 %v473, 4294901760
      %475 = vmatmul.f32.gmra.mxu0 %v474
      %v476 = vpop.f32.mrf.mxu0
      %v477 = vadd.f32 0.0, %v476
      %v478 = vand.u32 %v339, 4294901760
      %v479 = vsub.f32 %v339, %v478
      %v480 = vand.u32 %v479, 4294901760
      %v481 = vsub.f32 %v479, %v480
      %v482 = vand.u32 %v481, 4294901760
      %483 = vmatmul.f32.gmra.mxu0 %v482
      %v484 = vpop.f32.mrf.mxu0
      %v485 = vadd.f32 0.0, %v484
      %486 = vdwg.mxu0
      %487 = vmatpush.msra.mxu0 0.0
      %488 = vmatpush.msra.mxu0 0.0
      %489 = vmatpush.msra.mxu0 0.0
      %490 = vmatpush.msra.mxu0 0.0
      %491 = vmatpush.msra.mxu0 0.0
      %492 = vmatpush.msra.mxu0 0.0
      %493 = vmatpush.msra.mxu0 0.0
      %494 = vmatpush.msra.mxu0 0.0
      %495 = vmatpush.msra.mxu0 0.0
      %496 = vmatpush.msra.mxu0 0.0
      %497 = vmatpush.msra.mxu0 0.0
      %498 = vmatpush.msra.mxu0 0.0
      %499 = vmatpush.msra.mxu0 0.0
      %500 = vmatpush.msra.mxu0 0.0
      %501 = vmatpush.msra.mxu0 0.0
      %v502 = vand.u32 %v291, 4294901760
      %v503 = vsub.f32 %v291, %v502
      %v504 = vand.u32 %v503, 4294901760
      %v505 = vsub.f32 %v503, %v504
      %v506 = vand.u32 %v505, 4294901760
      %507 = vmatpush.msra.mxu0 %v506
      %v508 = vand.u32 %v294, 4294901760
      %509 = vmatmul.f32.gmra.mxu0 %v508
      %v510 = vpop.f32.mrf.mxu0
      %v511 = vadd.f32 %v365, %v510
      %v512 = vand.u32 %v297, 4294901760
      %513 = vmatmul.f32.gmra.mxu0 %v512
      %v514 = vpop.f32.mrf.mxu0
      %v515 = vadd.f32 %v373, %v514
      %v516 = vand.u32 %v300, 4294901760
      %517 = vmatmul.f32.gmra.mxu0 %v516
      %v518 = vpop.f32.mrf.mxu0
      %v519 = vadd.f32 %v381, %v518
      %v520 = vand.u32 %v303, 4294901760
      %521 = vmatmul.f32.gmra.mxu0 %v520
      %v522 = vpop.f32.mrf.mxu0
      %v523 = vadd.f32 %v389, %v522
      %v524 = vand.u32 %v306, 4294901760
      %525 = vmatmul.f32.gmra.mxu0 %v524
      %v526 = vpop.f32.mrf.mxu0
      %v527 = vadd.f32 %v397, %v526
      %v528 = vand.u32 %v309, 4294901760
      %529 = vmatmul.f32.gmra.mxu0 %v528
      %v530 = vpop.f32.mrf.mxu0
      %v531 = vadd.f32 %v405, %v530
      %v532 = vand.u32 %v312, 4294901760
      %533 = vmatmul.f32.gmra.mxu0 %v532
      %v534 = vpop.f32.mrf.mxu0
      %v535 = vadd.f32 %v413, %v534
      %v536 = vand.u32 %v315, 4294901760
      %537 = vmatmul.f32.gmra.mxu0 %v536
      %v538 = vpop.f32.mrf.mxu0
      %v539 = vadd.f32 %v421, %v538
      %v540 = vand.u32 %v318, 4294901760
      %541 = vmatmul.f32.gmra.mxu0 %v540
      %v542 = vpop.f32.mrf.mxu0
      %v543 = vadd.f32 %v429, %v542
      %v544 = vand.u32 %v321, 4294901760
      %545 = vmatmul.f32.gmra.mxu0 %v544
      %v546 = vpop.f32.mrf.mxu0
      %v547 = vadd.f32 %v437, %v546
      %v548 = vand.u32 %v324, 4294901760
      %549 = vmatmul.f32.gmra.mxu0 %v548
      %v550 = vpop.f32.mrf.mxu0
      %v551 = vadd.f32 %v445, %v550
      %v552 = vand.u32 %v327, 4294901760
      %553 = vmatmul.f32.gmra.mxu0 %v552
      %v554 = vpop.f32.mrf.mxu0
      %v555 = vadd.f32 %v453, %v554
      %v556 = vand.u32 %v330, 4294901760
      %557 = vmatmul.f32.gmra.mxu0 %v556
      %v558 = vpop.f32.mrf.mxu0
      %v559 = vadd.f32 %v461, %v558
      %v560 = vand.u32 %v333, 4294901760
      %561 = vmatmul.f32.gmra.mxu0 %v560
      %v562 = vpop.f32.mrf.mxu0
      %v563 = vadd.f32 %v469, %v562
      %v564 = vand.u32 %v336, 4294901760
      %565 = vmatmul.f32.gmra.mxu0 %v564
      %v566 = vpop.f32.mrf.mxu0
      %v567 = vadd.f32 %v477, %v566
      %v568 = vand.u32 %v339, 4294901760
      %569 = vmatmul.f32.gmra.mxu0 %v568
      %v570 = vpop.f32.mrf.mxu0
      %v571 = vadd.f32 %v485, %v570
      %572 = vdwg.mxu0
      %573 = vmatpush.msra.mxu0 0.0
      %574 = vmatpush.msra.mxu0 0.0
      %575 = vmatpush.msra.mxu0 0.0
      %576 = vmatpush.msra.mxu0 0.0
      %577 = vmatpush.msra.mxu0 0.0
      %578 = vmatpush.msra.mxu0 0.0
      %579 = vmatpush.msra.mxu0 0.0
      %580 = vmatpush.msra.mxu0 0.0
      %581 = vmatpush.msra.mxu0 0.0
      %582 = vmatpush.msra.mxu0 0.0
      %583 = vmatpush.msra.mxu0 0.0
      %584 = vmatpush.msra.mxu0 0.0
      %585 = vmatpush.msra.mxu0 0.0
      %586 = vmatpush.msra.mxu0 0.0
      %587 = vmatpush.msra.mxu0 0.0
      %v588 = vand.u32 %v291, 4294901760
      %v589 = vsub.f32 %v291, %v588
      %590 = vmatpush.msra.mxu0 %v589
      %v591 = vand.u32 %v294, 4294901760
      %v592 = vsub.f32 %v294, %v591
      %593 = vmatmul.f32.gmra.mxu0 %v592
      %v594 = vpop.f32.mrf.mxu0
      %v595 = vadd.f32 %v511, %v594
      %v596 = vand.u32 %v297, 4294901760
      %v597 = vsub.f32 %v297, %v596
      %598 = vmatmul.f32.gmra.mxu0 %v597
      %v599 = vpop.f32.mrf.mxu0
      %v600 = vadd.f32 %v515, %v599
      %v601 = vand.u32 %v300, 4294901760
      %v602 = vsub.f32 %v300, %v601
      %603 = vmatmul.f32.gmra.mxu0 %v602
      %v604 = vpop.f32.mrf.mxu0
      %v605 = vadd.f32 %v519, %v604
      %v606 = vand.u32 %v303, 4294901760
      %v607 = vsub.f32 %v303, %v606
      %608 = vmatmul.f32.gmra.mxu0 %v607
      %v609 = vpop.f32.mrf.mxu0
      %v610 = vadd.f32 %v523, %v609
      %v611 = vand.u32 %v306, 4294901760
      %v612 = vsub.f32 %v306, %v611
      %613 = vmatmul.f32.gmra.mxu0 %v612
      %v614 = vpop.f32.mrf.mxu0
      %v615 = vadd.f32 %v527, %v614
      %v616 = vand.u32 %v309, 4294901760
      %v617 = vsub.f32 %v309, %v616
      %618 = vmatmul.f32.gmra.mxu0 %v617
      %v619 = vpop.f32.mrf.mxu0
      %v620 = vadd.f32 %v531, %v619
      %v621 = vand.u32 %v312, 4294901760
      %v622 = vsub.f32 %v312, %v621
      %623 = vmatmul.f32.gmra.mxu0 %v622
      %v624 = vpop.f32.mrf.mxu0
      %v625 = vadd.f32 %v535, %v624
      %v626 = vand.u32 %v315, 4294901760
      %v627 = vsub.f32 %v315, %v626
      %628 = vmatmul.f32.gmra.mxu0 %v627
      %v629 = vpop.f32.mrf.mxu0
      %v630 = vadd.f32 %v539, %v629
      %v631 = vand.u32 %v318, 4294901760
      %v632 = vsub.f32 %v318, %v631
      %633 = vmatmul.f32.gmra.mxu0 %v632
      %v634 = vpop.f32.mrf.mxu0
      %v635 = vadd.f32 %v543, %v634
      %v636 = vand.u32 %v321, 4294901760
      %v637 = vsub.f32 %v321, %v636
      %638 = vmatmul.f32.gmra.mxu0 %v637
      %v639 = vpop.f32.mrf.mxu0
      %v640 = vadd.f32 %v547, %v639
      %v641 = vand.u32 %v324, 4294901760
      %v642 = vsub.f32 %v324, %v641
      %643 = vmatmul.f32.gmra.mxu0 %v642
      %v644 = vpop.f32.mrf.mxu0
      %v645 = vadd.f32 %v551, %v644
      %v646 = vand.u32 %v327, 4294901760
      %v647 = vsub.f32 %v327, %v646
      %648 = vmatmul.f32.gmra.mxu0 %v647
      %v649 = vpop.f32.mrf.mxu0
      %v650 = vadd.f32 %v555, %v649
      %v651 = vand.u32 %v330, 4294901760
      %v652 = vsub.f32 %v330, %v651
      %653 = vmatmul.f32.gmra.mxu0 %v652
      %v654 = vpop.f32.mrf.mxu0
      %v655 = vadd.f32 %v559, %v654
      %v656 = vand.u32 %v333, 4294901760
      %v657 = vsub.f32 %v333, %v656
      %658 = vmatmul.f32.gmra.mxu0 %v657
      %v659 = vpop.f32.mrf.mxu0
      %v660 = vadd.f32 %v563, %v659
      %v661 = vand.u32 %v336, 4294901760
      %v662 = vsub.f32 %v336, %v661
      %663 = vmatmul.f32.gmra.mxu0 %v662
      %v664 = vpop.f32.mrf.mxu0
      %v665 = vadd.f32 %v567, %v664
      %v666 = vand.u32 %v339, 4294901760
      %v667 = vsub.f32 %v339, %v666
      %668 = vmatmul.f32.gmra.mxu0 %v667
      %v669 = vpop.f32.mrf.mxu0
      %v670 = vadd.f32 %v571, %v669
      %671 = vdwg.mxu0
      %672 = vmatpush.msra.mxu0 0.0
      %673 = vmatpush.msra.mxu0 0.0
      %674 = vmatpush.msra.mxu0 0.0
      %675 = vmatpush.msra.mxu0 0.0
      %676 = vmatpush.msra.mxu0 0.0
      %677 = vmatpush.msra.mxu0 0.0
      %678 = vmatpush.msra.mxu0 0.0
      %679 = vmatpush.msra.mxu0 0.0
      %680 = vmatpush.msra.mxu0 0.0
      %681 = vmatpush.msra.mxu0 0.0
      %682 = vmatpush.msra.mxu0 0.0
      %683 = vmatpush.msra.mxu0 0.0
      %684 = vmatpush.msra.mxu0 0.0
      %685 = vmatpush.msra.mxu0 0.0
      %686 = vmatpush.msra.mxu0 0.0
      %v687 = vand.u32 %v291, 4294901760
      %688 = vmatpush.msra.mxu0 %v687
      %v689 = vand.u32 %v294, 4294901760
      %v690 = vsub.f32 %v294, %v689
      %v691 = vand.u32 %v690, 4294901760
      %692 = vmatmul.f32.gmra.mxu0 %v691
      %v693 = vpop.f32.mrf.mxu0
      %v694 = vadd.f32 %v595, %v693
      %v695 = vand.u32 %v297, 4294901760
      %v696 = vsub.f32 %v297, %v695
      %v697 = vand.u32 %v696, 4294901760
      %698 = vmatmul.f32.gmra.mxu0 %v697
      %v699 = vpop.f32.mrf.mxu0
      %v700 = vadd.f32 %v600, %v699
      %v701 = vand.u32 %v300, 4294901760
      %v702 = vsub.f32 %v300, %v701
      %v703 = vand.u32 %v702, 4294901760
      %704 = vmatmul.f32.gmra.mxu0 %v703
      %v705 = vpop.f32.mrf.mxu0
      %v706 = vadd.f32 %v605, %v705
      %v707 = vand.u32 %v303, 4294901760
      %v708 = vsub.f32 %v303, %v707
      %v709 = vand.u32 %v708, 4294901760
      %710 = vmatmul.f32.gmra.mxu0 %v709
      %v711 = vpop.f32.mrf.mxu0
      %v712 = vadd.f32 %v610, %v711
      %v713 = vand.u32 %v306, 4294901760
      %v714 = vsub.f32 %v306, %v713
      %v715 = vand.u32 %v714, 4294901760
      %716 = vmatmul.f32.gmra.mxu0 %v715
      %v717 = vpop.f32.mrf.mxu0
      %v718 = vadd.f32 %v615, %v717
      %v719 = vand.u32 %v309, 4294901760
      %v720 = vsub.f32 %v309, %v719
      %v721 = vand.u32 %v720, 4294901760
      %722 = vmatmul.f32.gmra.mxu0 %v721
      %v723 = vpop.f32.mrf.mxu0
      %v724 = vadd.f32 %v620, %v723
      %v725 = vand.u32 %v312, 4294901760
      %v726 = vsub.f32 %v312, %v725
      %v727 = vand.u32 %v726, 4294901760
      %728 = vmatmul.f32.gmra.mxu0 %v727
      %v729 = vpop.f32.mrf.mxu0
      %v730 = vadd.f32 %v625, %v729
      %v731 = vand.u32 %v315, 4294901760
      %v732 = vsub.f32 %v315, %v731
      %v733 = vand.u32 %v732, 4294901760
      %734 = vmatmul.f32.gmra.mxu0 %v733
      %v735 = vpop.f32.mrf.mxu0
      %v736 = vadd.f32 %v630, %v735
      %v737 = vand.u32 %v318, 4294901760
      %v738 = vsub.f32 %v318, %v737
      %v739 = vand.u32 %v738, 4294901760
      %740 = vmatmul.f32.gmra.mxu0 %v739
      %v741 = vpop.f32.mrf.mxu0
      %v742 = vadd.f32 %v635, %v741
      %v743 = vand.u32 %v321, 4294901760
      %v744 = vsub.f32 %v321, %v743
      %v745 = vand.u32 %v744, 4294901760
      %746 = vmatmul.f32.gmra.mxu0 %v745
      %v747 = vpop.f32.mrf.mxu0
      %v748 = vadd.f32 %v640, %v747
      %v749 = vand.u32 %v324, 4294901760
      %v750 = vsub.f32 %v324, %v749
      %v751 = vand.u32 %v750, 4294901760
      %752 = vmatmul.f32.gmra.mxu0 %v751
      %v753 = vpop.f32.mrf.mxu0
      %v754 = vadd.f32 %v645, %v753
      %v755 = vand.u32 %v327, 4294901760
      %v756 = vsub.f32 %v327, %v755
      %v757 = vand.u32 %v756, 4294901760
      %758 = vmatmul.f32.gmra.mxu0 %v757
      %v759 = vpop.f32.mrf.mxu0
      %v760 = vadd.f32 %v650, %v759
      %v761 = vand.u32 %v330, 4294901760
      %v762 = vsub.f32 %v330, %v761
      %v763 = vand.u32 %v762, 4294901760
      %764 = vmatmul.f32.gmra.mxu0 %v763
      %v765 = vpop.f32.mrf.mxu0
      %v766 = vadd.f32 %v655, %v765
      %v767 = vand.u32 %v333, 4294901760
      %v768 = vsub.f32 %v333, %v767
      %v769 = vand.u32 %v768, 4294901760
      %770 = vmatmul.f32.gmra.mxu0 %v769
      %v771 = vpop.f32.mrf.mxu0
      %v772 = vadd.f32 %v660, %v771
      %v773 = vand.u32 %v336, 4294901760
      %v774 = vsub.f32 %v336, %v773
      %v775 = vand.u32 %v774, 4294901760
      %776 = vmatmul.f32.gmra.mxu0 %v775
      %v777 = vpop.f32.mrf.mxu0
      %v778 = vadd.f32 %v665, %v777
      %v779 = vand.u32 %v339, 4294901760
      %v780 = vsub.f32 %v339, %v779
      %v781 = vand.u32 %v780, 4294901760
      %782 = vmatmul.f32.gmra.mxu0 %v781
      %v783 = vpop.f32.mrf.mxu0
      %v784 = vadd.f32 %v670, %v783
      %785 = vdwg.mxu0
      %786 = vmatpush.msra.mxu0 0.0
      %787 = vmatpush.msra.mxu0 0.0
      %788 = vmatpush.msra.mxu0 0.0
      %789 = vmatpush.msra.mxu0 0.0
      %790 = vmatpush.msra.mxu0 0.0
      %791 = vmatpush.msra.mxu0 0.0
      %792 = vmatpush.msra.mxu0 0.0
      %793 = vmatpush.msra.mxu0 0.0
      %794 = vmatpush.msra.mxu0 0.0
      %795 = vmatpush.msra.mxu0 0.0
      %796 = vmatpush.msra.mxu0 0.0
      %797 = vmatpush.msra.mxu0 0.0
      %798 = vmatpush.msra.mxu0 0.0
      %799 = vmatpush.msra.mxu0 0.0
      %800 = vmatpush.msra.mxu0 0.0
      %v801 = vand.u32 %v291, 4294901760
      %v802 = vsub.f32 %v291, %v801
      %v803 = vand.u32 %v802, 4294901760
      %804 = vmatpush.msra.mxu0 %v803
      %v805 = vand.u32 %v294, 4294901760
      %806 = vmatmul.f32.gmra.mxu0 %v805
      %v807 = vpop.f32.mrf.mxu0
      %v808 = vadd.f32 %v694, %v807
      %v809 = vand.u32 %v297, 4294901760
      %810 = vmatmul.f32.gmra.mxu0 %v809
      %v811 = vpop.f32.mrf.mxu0
      %v812 = vadd.f32 %v700, %v811
      %v813 = vand.u32 %v300, 4294901760
      %814 = vmatmul.f32.gmra.mxu0 %v813
      %v815 = vpop.f32.mrf.mxu0
      %v816 = vadd.f32 %v706, %v815
      %v817 = vand.u32 %v303, 4294901760
      %818 = vmatmul.f32.gmra.mxu0 %v817
      %v819 = vpop.f32.mrf.mxu0
      %v820 = vadd.f32 %v712, %v819
      %v821 = vand.u32 %v306, 4294901760
      %822 = vmatmul.f32.gmra.mxu0 %v821
      %v823 = vpop.f32.mrf.mxu0
      %v824 = vadd.f32 %v718, %v823
      %v825 = vand.u32 %v309, 4294901760
      %826 = vmatmul.f32.gmra.mxu0 %v825
      %v827 = vpop.f32.mrf.mxu0
      %v828 = vadd.f32 %v724, %v827
      %v829 = vand.u32 %v312, 4294901760
      %830 = vmatmul.f32.gmra.mxu0 %v829
      %v831 = vpop.f32.mrf.mxu0
      %v832 = vadd.f32 %v730, %v831
      %v833 = vand.u32 %v315, 4294901760
      %834 = vmatmul.f32.gmra.mxu0 %v833
      %v835 = vpop.f32.mrf.mxu0
      %v836 = vadd.f32 %v736, %v835
      %v837 = vand.u32 %v318, 4294901760
      %838 = vmatmul.f32.gmra.mxu0 %v837
      %v839 = vpop.f32.mrf.mxu0
      %v840 = vadd.f32 %v742, %v839
      %v841 = vand.u32 %v321, 4294901760
      %842 = vmatmul.f32.gmra.mxu0 %v841
      %v843 = vpop.f32.mrf.mxu0
      %v844 = vadd.f32 %v748, %v843
      %v845 = vand.u32 %v324, 4294901760
      %846 = vmatmul.f32.gmra.mxu0 %v845
      %v847 = vpop.f32.mrf.mxu0
      %v848 = vadd.f32 %v754, %v847
      %v849 = vand.u32 %v327, 4294901760
      %850 = vmatmul.f32.gmra.mxu0 %v849
      %v851 = vpop.f32.mrf.mxu0
      %v852 = vadd.f32 %v760, %v851
      %v853 = vand.u32 %v330, 4294901760
      %854 = vmatmul.f32.gmra.mxu0 %v853
      %v855 = vpop.f32.mrf.mxu0
      %v856 = vadd.f32 %v766, %v855
      %v857 = vand.u32 %v333, 4294901760
      %858 = vmatmul.f32.gmra.mxu0 %v857
      %v859 = vpop.f32.mrf.mxu0
      %v860 = vadd.f32 %v772, %v859
      %v861 = vand.u32 %v336, 4294901760
      %862 = vmatmul.f32.gmra.mxu0 %v861
      %v863 = vpop.f32.mrf.mxu0
      %v864 = vadd.f32 %v778, %v863
      %v865 = vand.u32 %v339, 4294901760
      %866 = vmatmul.f32.gmra.mxu0 %v865
      %v867 = vpop.f32.mrf.mxu0
      %v868 = vadd.f32 %v784, %v867
      %869 = vdwg.mxu0
      %870 = vmatpush.msra.mxu0 0.0
      %871 = vmatpush.msra.mxu0 0.0
      %872 = vmatpush.msra.mxu0 0.0
      %873 = vmatpush.msra.mxu0 0.0
      %874 = vmatpush.msra.mxu0 0.0
      %875 = vmatpush.msra.mxu0 0.0
      %876 = vmatpush.msra.mxu0 0.0
      %877 = vmatpush.msra.mxu0 0.0
      %878 = vmatpush.msra.mxu0 0.0
      %879 = vmatpush.msra.mxu0 0.0
      %880 = vmatpush.msra.mxu0 0.0
      %881 = vmatpush.msra.mxu0 0.0
      %882 = vmatpush.msra.mxu0 0.0
      %883 = vmatpush.msra.mxu0 0.0
      %884 = vmatpush.msra.mxu0 0.0
      %v885 = vand.u32 %v291, 4294901760
      %886 = vmatpush.msra.mxu0 %v885
      %v887 = vand.u32 %v294, 4294901760
      %888 = vmatmul.f32.gmra.mxu0 %v887
      %v889 = vpop.f32.mrf.mxu0
      %v890 = vadd.f32 %v808, %v889
      %v891 = vand.u32 %v297, 4294901760
      %892 = vmatmul.f32.gmra.mxu0 %v891
      %v893 = vpop.f32.mrf.mxu0
      %v894 = vadd.f32 %v812, %v893
      %v895 = vand.u32 %v300, 4294901760
      %896 = vmatmul.f32.gmra.mxu0 %v895
      %v897 = vpop.f32.mrf.mxu0
      %v898 = vadd.f32 %v816, %v897
      %v899 = vand.u32 %v303, 4294901760
      %900 = vmatmul.f32.gmra.mxu0 %v899
      %v901 = vpop.f32.mrf.mxu0
      %v902 = vadd.f32 %v820, %v901
      %v903 = vand.u32 %v306, 4294901760
      %904 = vmatmul.f32.gmra.mxu0 %v903
      %v905 = vpop.f32.mrf.mxu0
      %v906 = vadd.f32 %v824, %v905
      %v907 = vand.u32 %v309, 4294901760
      %908 = vmatmul.f32.gmra.mxu0 %v907
      %v909 = vpop.f32.mrf.mxu0
      %v910 = vadd.f32 %v828, %v909
      %v911 = vand.u32 %v312, 4294901760
      %912 = vmatmul.f32.gmra.mxu0 %v911
      %v913 = vpop.f32.mrf.mxu0
      %v914 = vadd.f32 %v832, %v913
      %v915 = vand.u32 %v315, 4294901760
      %916 = vmatmul.f32.gmra.mxu0 %v915
      %v917 = vpop.f32.mrf.mxu0
      %v918 = vadd.f32 %v836, %v917
      %v919 = vand.u32 %v318, 4294901760
      %920 = vmatmul.f32.gmra.mxu0 %v919
      %v921 = vpop.f32.mrf.mxu0
      %v922 = vadd.f32 %v840, %v921
      %v923 = vand.u32 %v321, 4294901760
      %924 = vmatmul.f32.gmra.mxu0 %v923
      %v925 = vpop.f32.mrf.mxu0
      %v926 = vadd.f32 %v844, %v925
      %v927 = vand.u32 %v324, 4294901760
      %928 = vmatmul.f32.gmra.mxu0 %v927
      %v929 = vpop.f32.mrf.mxu0
      %v930 = vadd.f32 %v848, %v929
      %v931 = vand.u32 %v327, 4294901760
      %932 = vmatmul.f32.gmra.mxu0 %v931
      %v933 = vpop.f32.mrf.mxu0
      %v934 = vadd.f32 %v852, %v933
      %v935 = vand.u32 %v330, 4294901760
      %936 = vmatmul.f32.gmra.mxu0 %v935
      %v937 = vpop.f32.mrf.mxu0
      %v938 = vadd.f32 %v856, %v937
      %v939 = vand.u32 %v333, 4294901760
      %940 = vmatmul.f32.gmra.mxu0 %v939
      %v941 = vpop.f32.mrf.mxu0
      %v942 = vadd.f32 %v860, %v941
      %v943 = vand.u32 %v336, 4294901760
      %944 = vmatmul.f32.gmra.mxu0 %v943
      %v945 = vpop.f32.mrf.mxu0
      %v946 = vadd.f32 %v864, %v945
      %v947 = vand.u32 %v339, 4294901760
      %948 = vmatmul.f32.gmra.mxu0 %v947
      %v949 = vpop.f32.mrf.mxu0
      %v950 = vadd.f32 %v868, %v949
      %951 = vdwg.mxu0
      %vm952 = vcmp.lt.f32.partialorder %v890, 0.0025
      %vm953 = vcmp.lt.f32.partialorder %v894, 0.0025
      %vm954 = vcmp.lt.f32.partialorder %v898, 0.0025
      %vm955 = vcmp.lt.f32.partialorder %v902, 0.0025
      %vm956 = vcmp.lt.f32.partialorder %v906, 0.0025
      %vm957 = vcmp.lt.f32.partialorder %v910, 0.0025
      %vm958 = vcmp.lt.f32.partialorder %v914, 0.0025
      %vm959 = vcmp.lt.f32.partialorder %v918, 0.0025
      %vm960 = vcmp.lt.f32.partialorder %v922, 0.0025
      %vm961 = vcmp.lt.f32.partialorder %v926, 0.0025
      %vm962 = vcmp.lt.f32.partialorder %v930, 0.0025
      %vm963 = vcmp.lt.f32.partialorder %v934, 0.0025
      %vm964 = vcmp.lt.f32.partialorder %v938, 0.0025
      %vm965 = vcmp.lt.f32.partialorder %v942, 0.0025
      %vm966 = vcmp.lt.f32.partialorder %v946, 0.0025
      %vm967 = vcmp.lt.f32.partialorder %v950, 0.0025
      %v968 = vsel %vm952, 99980000.0, %v890
      %v969 = vsel %vm953, 99980000.0, %v894
      %v970 = vsel %vm954, 99980000.0, %v898
      %v971 = vsel %vm955, 99980000.0, %v902
      %v972 = vsel %vm956, 99980000.0, %v906
      %v973 = vsel %vm957, 99980000.0, %v910
      %v974 = vsel %vm958, 99980000.0, %v914
      %v975 = vsel %vm959, 99980000.0, %v918
      %v976 = vsel %vm960, 99980000.0, %v922
      %v977 = vsel %vm961, 99980000.0, %v926
      %v978 = vsel %vm962, 99980000.0, %v930
      %v979 = vsel %vm963, 99980000.0, %v934
      %v980 = vsel %vm964, 99980000.0, %v938
      %v981 = vsel %vm965, 99980000.0, %v942
      %v982 = vsel %vm966, 99980000.0, %v946
      %v983 = vsel %vm967, 99980000.0, %v950
      %984 = vset.pattern.permute.xlu0 5
      %985 = vperm.xlu0 %984, %v275
      %v986 = vpop.permute.xlu0 %985
      %988 = vset.pattern.permute.xlu0 5
      %989 = vperm.xlu0 %988, %v276
      %v990 = vpop.permute.xlu0 %989
      %992 = vset.pattern.permute.xlu0 5
      %993 = vperm.xlu0 %992, %v277
      %v994 = vpop.permute.xlu0 %993
      %996 = vset.pattern.permute.xlu0 5
      %997 = vperm.xlu0 %996, %v278
      %v998 = vpop.permute.xlu0 %997
      %1000 = vset.pattern.permute.xlu0 5
      %1001 = vperm.xlu0 %1000, %v279
      %v1002 = vpop.permute.xlu0 %1001
      %1004 = vset.pattern.permute.xlu0 5
      %1005 = vperm.xlu0 %1004, %v280
      %v1006 = vpop.permute.xlu0 %1005
      %1008 = vset.pattern.permute.xlu0 5
      %1009 = vperm.xlu0 %1008, %v281
      %v1010 = vpop.permute.xlu0 %1009
      %1012 = vset.pattern.permute.xlu0 5
      %1013 = vperm.xlu0 %1012, %v282
      %v1014 = vpop.permute.xlu0 %1013
      %1016 = vset.pattern.permute.xlu0 5
      %1017 = vperm.xlu0 %1016, %v283
      %v1018 = vpop.permute.xlu0 %1017
      %1020 = vset.pattern.permute.xlu0 5
      %1021 = vperm.xlu0 %1020, %v284
      %v1022 = vpop.permute.xlu0 %1021
      %1024 = vset.pattern.permute.xlu0 5
      %1025 = vperm.xlu0 %1024, %v285
      %v1026 = vpop.permute.xlu0 %1025
      %1028 = vset.pattern.permute.xlu0 5
      %1029 = vperm.xlu0 %1028, %v286
      %v1030 = vpop.permute.xlu0 %1029
      %1032 = vset.pattern.permute.xlu0 5
      %1033 = vperm.xlu0 %1032, %v287
      %v1034 = vpop.permute.xlu0 %1033
      %1036 = vset.pattern.permute.xlu0 5
      %1037 = vperm.xlu0 %1036, %v288
      %v1038 = vpop.permute.xlu0 %1037
      %1040 = vset.pattern.permute.xlu0 5
      %1041 = vperm.xlu0 %1040, %v289
      %v1042 = vpop.permute.xlu0 %1041
      %1044 = vset.pattern.permute.xlu0 5
      %1045 = vperm.xlu0 %1044, %v290
      %v1046 = vpop.permute.xlu0 %1045
      %v1048 = vadd.f32 %v968, %v986
      %v1049 = vadd.f32 %v969, %v990
      %v1050 = vadd.f32 %v970, %v994
      %v1051 = vadd.f32 %v971, %v998
      %v1052 = vadd.f32 %v972, %v1002
      %v1053 = vadd.f32 %v973, %v1006
      %v1054 = vadd.f32 %v974, %v1010
      %v1055 = vadd.f32 %v975, %v1014
      %v1056 = vadd.f32 %v976, %v1018
      %v1057 = vadd.f32 %v977, %v1022
      %v1058 = vadd.f32 %v978, %v1026
      %v1059 = vadd.f32 %v979, %v1030
      %v1060 = vadd.f32 %v980, %v1034
      %v1061 = vadd.f32 %v981, %v1038
      %v1062 = vadd.f32 %v982, %v1042
      %v1063 = vadd.f32 %v983, %v1046
      %v1064 = vld [vmem:[#allocation2] sm:$0x1]
      %v1065 = vmin.f32 %v968, %v972
      %v1066 = vmin.f32 %v969, %v973
      %v1067 = vmin.f32 %v970, %v974
      %v1068 = vmin.f32 %v971, %v975
      %v1069 = vmin.f32 %v1065, %v976
      %v1070 = vmin.f32 %v1066, %v977
      %v1071 = vmin.f32 %v1067, %v978
      %v1072 = vmin.f32 %v1068, %v979
      %v1073 = vmin.f32 %v1069, %v980
      %v1074 = vmin.f32 %v1070, %v981
      %v1075 = vmin.f32 %v1071, %v982
      %v1076 = vmin.f32 %v1072, %v983
      %v1077 = vmin.f32 %v1073, %v1074
      %v1078 = vmin.f32 %v1075, %v1076
      %v1079 = vmin.f32 %v1077, %v1078
      %v1080 = vrot.slane %v1079, 4
      %v1081 = vmin.f32 %v1079, %v1080
      %v1082 = vrot.slane %v1081, 2
      %v1083 = vmin.f32 %v1081, %v1082
      %v1084 = vrot.slane %v1083, 1
      %v1085 = vmin.f32 %v1083, %v1084
      %v1086 = vmin.f32 %v1064, %v1085
      %1087 = vst [vmem:[#allocation2] sm:$0x1] %v1086
      %v1088 = vld [vmem:[#allocation3] sm:$0x1]
      %v1089 = vmin.f32 %v1048, %v1052
      %v1090 = vmin.f32 %v1049, %v1053
      %v1091 = vmin.f32 %v1050, %v1054
      %v1092 = vmin.f32 %v1051, %v1055
      %v1093 = vmin.f32 %v1089, %v1056
      %v1094 = vmin.f32 %v1090, %v1057
      %v1095 = vmin.f32 %v1091, %v1058
      %v1096 = vmin.f32 %v1092, %v1059
      %v1097 = vmin.f32 %v1093, %v1060
      %v1098 = vmin.f32 %v1094, %v1061
      %v1099 = vmin.f32 %v1095, %v1062
      %v1100 = vmin.f32 %v1096, %v1063
      %v1101 = vmin.f32 %v1097, %v1098
      %v1102 = vmin.f32 %v1099, %v1100
      %v1103 = vmin.f32 %v1101, %v1102
      %v1104 = vrot.slane %v1103, 4
      %v1105 = vmin.f32 %v1103, %v1104
      %v1106 = vrot.slane %v1105, 2
      %v1107 = vmin.f32 %v1105, %v1106
      %v1108 = vrot.slane %v1107, 1
      %v1109 = vmin.f32 %v1107, %v1108
      %v1110 = vmin.f32 %v1088, %v1109
      %1111 = vst [vmem:[#allocation3] sm:$0x1] %v1110
      %p1112 = scmp.eq.s32.totalorder %s21, 1
      // Predicated region
      $region41: #{tpu_custom_call.1} parent=31 // pred_check
        %p1113 = pneg %p1112
      $region42: #{tpu_custom_call.1} parent=31 // pred_check_branch
        %1115 = sbr.rel (%p1113) target = $region44
      $region43: #{tpu_custom_call.1} parent=31 // pred_region
        %v1116 = vld [vmem:[%s239] sm:$0x1]
        %v1117 = vld [vmem:[#allocation2] sm:$0x1]
        %v1118 = vld [vmem:[#allocation3] sm:$0x1]
        %vm1119 = vcmp.lt.f32.partialorder %v1117, 0.36
        %v1120 = vsel %vm1119, 1, 0
        %v1121 = vcvt.s32.f32 %v1120
        %vm1122 = vcmp.le.f32.partialorder %v1118, %v1117
        %v1124 = vperm.slane %v1121, 0
        %v1126 = vmul.f32 %v291, %v1124
        %v1127 = vand.u32 2147483647, %v1116
        %v1128 = vsub.f32 %v1116, 0.1
        %v1129 = vand.u32 2147483647, %v1128
        %v1130 = vsel %vm1122, %v1127, %v1129
        %v1132 = vperm.slane %v1130, 0
        %v1134 = vmul.f32 %v1126, %v1132
        %v1135 = vld [vmem:[#allocation4] sm:$0x1]
        %vm1136 = vcmask 1046534
        %v1137 = vsel %vm1136, %v1134, 0.0
        %1138 = vadd.xlane.f32.xlu0 %v1137
        %v1139 = vpop.xlane.xlu0 %1138
        %v1141 = vperm.slane %v1139, 6
        %v1143 = vadd.f32 %v1135, %v1141
        %vm1144 = vcmask 0
        %1145 = vst.msk [vmem:[#allocation4] sm:$0x1] %vm1144, %v1143
        %v1146 = vld [vmem:[#allocation5] sm:$0x1]
        %v1147 = vsel %vm1122, 1, 0
        %v1148 = vcvt.s32.f32 %v1147
        %v1150 = vperm.slane %v1148, 0
        %v1152 = vmul.f32 %v291, %v1150
        %v1153 = vsel %vm1136, %v1152, 0.0
        %1154 = vadd.xlane.f32.xlu0 %v1153
        %v1155 = vpop.xlane.xlu0 %1154
        %v1157 = vperm.slane %v1155, 6
        %v1159 = vadd.f32 %v1146, %v1157
        %1160 = vst.msk [vmem:[#allocation5] sm:$0x1] %vm1144, %v1159
      $region44: #{tpu_custom_call.1} parent=31 // pred_fallthru
        _
      %p1161 = scmp.eq.s32.totalorder %s20, 1
      %p1162 = pnand %p1161, %p1112
      %p1163 = pneg %p1162
      // Predicated region
      $region45: #{tpu_custom_call.1} parent=31 // pred_check
        _
      $region46: #{tpu_custom_call.1} parent=31 // pred_check_branch
        %1165 = sbr.rel (%p1162) target = $region48
      $region47: #{tpu_custom_call.1} parent=31 // pred_region
        %v1166 = vld [vmem:[#allocation5] sm:$0x1]
        %vm1167 = vcmp.gt.f32.partialorder %v1166, 0.0
        %v1168 = vsel %vm1167, 1, 0
        %v1169 = vcvt.s32.f32 %v1168
        %v1170 = vld [vmem:[#allocation4] sm:$0x1]
        %v1171 = vmul.f32 %v1170, 0.005
        %v1172 = vmul.f32 %v1171, %v1169
        %vm1173 = vcmask 0
        %1174 = vst.msk [vmem:[%s260] sm:$0x1] %vm1173, %v1172
      $region48: #{tpu_custom_call.1} parent=31 // pred_fallthru
        _
      %p1175 = scmp.lt.s32.totalorder %s19, 1
      %s1176 = scalar_select %p1175, %s19, 1
      %s1177 = scalar_lea.vmem %s3, %s1176
      // Predicated region
      $region49: #{tpu_custom_call.1} parent=31 // pred_check
        %p1178 = pneg %p135
      $region50: #{tpu_custom_call.1} parent=31 // pred_check_branch
        %1180 = sbr.rel (%p1178) target = $region52
      $region51: #{tpu_custom_call.1} parent=31 // pred_region
        _
      $region52: #{tpu_custom_call.1} parent=31 // pred_fallthru
        _
    $region32: #{tpu_custom_call.1} parent=5 // pred_fallthru
      _
    %p1181 = scmp.le.s32.totalorder 2, %s9
    // Predicated region
    $region53: #{tpu_custom_call.1} parent=5 // pred_check
      %p1182 = pneg %p1181
    $region54: #{tpu_custom_call.1} parent=5 // pred_check_branch
      %1184 = sbr.rel (%p1182) target = $region56
    $region55: #{tpu_custom_call.1} parent=5 // pred_region
      %s1185 = ssub.s32 %s9, 2
      // Predicated region
      $region57: #{tpu_custom_call.1} parent=55 // pred_check
        %p1186 = pneg %p141
      $region58: #{tpu_custom_call.1} parent=55 // pred_check_branch
        %1188 = sbr.rel (%p1186) target = $region60
      $region59: #{tpu_custom_call.1} parent=55 // pred_region
        %p1189 = scmp.lt.s32.totalorder %s22, 1
        %s1190 = scalar_select %p1189, %s22, 1
        %s1191 = scalar_lea.vmem %s3, %s1190
      $region60: #{tpu_custom_call.1} parent=55 // pred_fallthru
        _
    $region56: #{tpu_custom_call.1} parent=5 // pred_fallthru
      _
  $region6: #{tpu_custom_call.1} parent=0 // loop_footer
    %s13 = sadd.s32 1, %s9
  $region7: #{tpu_custom_call.1} parent=0 // loop_footer_branch
    %8 = sbr.rel target = $region3
  $region8: #{tpu_custom_call.1} parent=0 // loop_exit
    _

</llo_original>
